<compile_context>
chip_gen: v6e
topology: v6e:2x2x1
jax: 0.10.0
libtpu: 0.0.40
codegen_flags: <defaults>
</compile_context>

<pallas_src>
import functools
import math

import numpy as np

import jax
import jax.numpy as jnp
from jax.experimental import pallas as pl
from jax.experimental.pallas import tpu as pltpu


def _adaptive_pool_matrix(out_size: int, in_size: int) -> np.ndarray:
    """Row-averaging matrix P (out_size, in_size) matching AdaptiveAvgPool."""
    P = np.zeros((out_size, in_size), dtype=np.float32)
    for i in range(out_size):
        start = (i * in_size) // out_size
        end = ((i + 1) * in_size + out_size - 1) // out_size  # ceil
        P[i, start:end] = 1.0 / (end - start)
    return P


def _round_up(a: int, b: int) -> int:
    return -(-a // b) * b


def _vmem_cost_estimate(tm, H, W, OH, OW, in_itemsize, out_itemsize):
    """Approximate VMEM bytes for one grid step (padded to (8,128) tiles)."""
    in_blk = in_itemsize * tm * _round_up(H, 8) * _round_up(W, 128)
    out_blk = out_itemsize * tm * _round_up(OH, 8) * _round_up(OW, 128)
    inv = 4 * (_round_up(OH, 8) * _round_up(H, 128)
               + _round_up(W, 8) * _round_up(OW, 128))
    # In-kernel f32 intermediates: x cast, y3, broadcast Ph, f32 out.
    interm = 4 * tm * (_round_up(H, 8) * _round_up(W, 128)
                       + _round_up(H, 8) * _round_up(OW, 128)
                       + _round_up(OH, 8) * _round_up(H, 128)
                       + _round_up(OH, 8) * _round_up(OW, 128))
    # Pipelined operands are double-buffered.
    return 2 * (in_blk + out_blk + inv) + interm


def _choose_block_tm(M, H, W, OH, OW, in_itemsize, out_itemsize,
                     budget_bytes=24 << 20):
    """Largest divisor of M whose padded VMEM footprint fits the budget.

    Prefers TM <= M//2 so the grid keeps >=2 parallel steps (feeds both v7x
    TensorCores); cost is negligible on single-TC v5e/v6e.
    """
    divisors = set()
    for d in range(1, int(math.isqrt(M)) + 1):
        if M % d == 0:
            divisors.add(d)
            divisors.add(M // d)
    divisors = sorted(divisors, reverse=True)
    preferred = [d for d in divisors if d <= max(M // 2, 1)] or divisors
    for tm in preferred:
        if _vmem_cost_estimate(tm, H, W, OH, OW,
                               in_itemsize, out_itemsize) <= budget_bytes:
            return tm
    return 1


def _adaptive_avg_pool_kernel(x_ref, ph_ref, pwT_ref, o_ref):
    # x_ref:   (TM, H, W)  block of TM whole images, native input dtype
    # ph_ref:  (OH, H)     row-pooling matrix (f32, grid-invariant)
    # pwT_ref: (W, OW)     column-pooling matrix, transposed (f32, invariant)
    # o_ref:   (TM, OH, OW) native output dtype
    tm, h, w = x_ref.shape
    oh = ph_ref.shape[0]
    ow = pwT_ref.shape[1]

    x = x_ref[...].astype(jnp.float32)                          # cast in-kernel
    # 1) Column pooling: one big 2-D MXU matmul over all TM images at once.
    #    (TM, H, W) -> (TM*H, W) is a free major-dim merge (H % 8 == 0 here).
    y = jnp.dot(x.reshape(tm * h, w), pwT_ref[...],
                preferred_element_type=jnp.float32)              # (TM*H, OW)
    y3 = y.reshape(tm, h, ow)                                    # (TM, H, OW)
    # 2) Row pooling: batched contraction over h (flash-attn 'bqk,bkd' shape).
    ph_b = jnp.broadcast_to(ph_ref[...][None], (tm, oh, h))      # (TM, OH, H)
    out = jnp.einsum('toh,thv->tov', ph_b, y3,
                     preferred_element_type=jnp.float32)         # (TM, OH, OW)
    o_ref[...] = out.astype(o_ref.dtype)                         # cast at store


@functools.partial(jax.jit, static_argnames=("new_size",))
def video_downsize(x, new_size):
    """Forward pass of VideoDownsizer: AdaptiveAvgPool2d(new_size) on (..., H, W)."""
    orig_shape = x.shape
    H, W = int(orig_shape[-2]), int(orig_shape[-1])
    OH, OW = int(new_size[0]), int(new_size[1])
    lead = tuple(orig_shape[:-2])
    M = int(np.prod(lead)) if lead else 1

    # AdaptiveAvgPool2d only accepts floating inputs; promote anything else.
    if not jnp.issubdtype(x.dtype, jnp.floating):
        x = x.astype(jnp.float32)
    out_dtype = x.dtype
    in_itemsize = jnp.dtype(x.dtype).itemsize
    out_itemsize = jnp.dtype(out_dtype).itemsize

    ph = jnp.asarray(_adaptive_pool_matrix(OH, H))               # (OH, H)
    pwT = jnp.asarray(_adaptive_pool_matrix(OW, W).T)            # (W, OW)

    TM = _choose_block_tm(M, H, W, OH, OW, in_itemsize, out_itemsize)

    # Contiguous-merge reshape only (no relayout, no dtype copy): (..., H, W) -> (M, H, W).
    xf = x.reshape(M, H, W)

    grid = (M // TM,)
    flops = 2 * M * H * W * OW + 2 * M * OH * H * OW
    bytes_accessed = (M * H * W * in_itemsize + M * OH * OW * out_itemsize
                      + 4 * (OH * H + W * OW))

    out = pl.pallas_call(
        _adaptive_avg_pool_kernel,
        out_shape=jax.ShapeDtypeStruct((M, OH, OW), out_dtype),
        grid_spec=pltpu.PrefetchScalarGridSpec(
            num_scalar_prefetch=0,
            grid=grid,
            in_specs=[
                pl.BlockSpec((TM, H, W), lambda i: (i, 0, 0)),
                pl.BlockSpec((OH, H), lambda i: (0, 0)),
                pl.BlockSpec((W, OW), lambda i: (0, 0)),
            ],
            out_specs=pl.BlockSpec((TM, OH, OW), lambda i: (i, 0, 0)),
        ),
        compiler_params=pltpu.CompilerParams(
            dimension_semantics=("parallel",),
            vmem_limit_bytes=48 << 20),
        cost_estimate=pl.CostEstimate(
            flops=flops, transcendentals=0, bytes_accessed=bytes_accessed),
    )(xf, ph, pwT)

    # Contiguous-merge reshape back to the video layout with new spatial size.
    return out.reshape(lead + (OH, OW))


def _reference(x, new_size):
    """Independent plain-JAX reference using explicit adaptive windows."""
    *lead, H, W = x.shape
    OH, OW = new_size
    xf = jnp.reshape(x, (-1, H, W))
    rows = []
    for i in range(OH):
        hs = (i * H) // OH
        he = ((i + 1) * H + OH - 1) // OH
        cols = []
        for j in range(OW):
            ws = (j * W) // OW
            we = ((j + 1) * W + OW - 1) // OW
            cols.append(jnp.mean(xf[:, hs:he, ws:we], axis=(1, 2)))
        rows.append(jnp.stack(cols, axis=-1))
    out = jnp.stack(rows, axis=-2)  # (M, OH, OW)
    return out.reshape(tuple(lead) + (OH, OW))


if __name__ == "__main__":
    # Small video tensor: (N=2, C=4, T=2, H=16, W=16); downsize spatial dims.
    key = jax.random.PRNGKey(0)
    N, C, T, H, W = 2, 4, 2, 16, 16
    x = jax.random.normal(key, (N, C, T, H, W), jnp.float32)

    # Evenly divisible case: 16x16 -> 8x8.
    new_size = (8, 8)
    out = jax.block_until_ready(video_downsize(x, new_size))
    assert out.shape == (N, C, T, 8, 8)
    ref = _reference(x, new_size)
    assert jnp.allclose(out, ref, rtol=2e-4, atol=2e-4), (
        float(jnp.max(jnp.abs(out - ref))))

    # Non-divisible (truly adaptive) case: 16x16 -> 7x5.
    new_size2 = (7, 5)
    out2 = jax.block_until_ready(video_downsize(x, new_size2))
    assert out2.shape == (N, C, T, 7, 5)
    ref2 = _reference(x, new_size2)
    assert jnp.allclose(out2, ref2, rtol=2e-4, atol=2e-4), (
        float(jnp.max(jnp.abs(out2 - ref2))))

    print("KERNEL_OK")
</pallas_src>

<mosaic_0001>
module attributes {stable_mosaic.version = 11 : i64} {
  func.func @_adaptive_avg_pool_kernel(%arg0: i32, %arg1: memref<8x16x16xf32, #tpu.memory_space<vmem>>, %arg2: memref<8x16xf32, #tpu.memory_space<vmem>>, %arg3: memref<16x8xf32, #tpu.memory_space<vmem>>, %arg4: memref<8x8x8xf32, #tpu.memory_space<vmem>>) attributes {dimension_semantics = [#tpu.dimension_semantics<parallel>], iteration_bounds = array<i64: 2>, scalar_prefetch = 0 : i64, scratch_operands = 0 : i64, tpu.core_type = #tpu.core_type<tc>, window_params = [{transform_indices = @transform_0, window_bounds = array<i64: 8, 16, 16>}, {pipeline_mode = #tpu.pipeline_mode<synchronous>, transform_indices = @transform_1, window_bounds = array<i64: 8, 16>}, {pipeline_mode = #tpu.pipeline_mode<synchronous>, transform_indices = @transform_2, window_bounds = array<i64: 16, 8>}, {transform_indices = @transform_3, window_bounds = array<i64: 8, 8, 8>}]} {
    %c0 = arith.constant 0 : index
    %c0_0 = arith.constant 0 : index
    %c0_1 = arith.constant 0 : index
    %0 = vector.load %arg1[%c0, %c0_0, %c0_1] : memref<8x16x16xf32, #tpu.memory_space<vmem>>, vector<8x16x16xf32>
    %1 = vector.shape_cast %0 : vector<8x16x16xf32> to vector<128x16xf32>
    %c0_2 = arith.constant 0 : index
    %c0_3 = arith.constant 0 : index
    %2 = vector.load %arg3[%c0_2, %c0_3] : memref<16x8xf32, #tpu.memory_space<vmem>>, vector<16x8xf32>
    %cst = arith.constant dense<0.000000e+00> : vector<128x8xf32>
    %3 = tpu.matmul %1, %2, %cst {dimension_numbers = #tpu.dot_dimension_numbers<[1], [0], [0], [1], [0, 0, 1, 1], [], []>} : vector<128x16xf32>, vector<16x8xf32>, vector<128x8xf32> -> vector<128x8xf32>
    %4 = vector.shape_cast %3 : vector<128x8xf32> to vector<8x16x8xf32>
    %c0_4 = arith.constant 0 : index
    %c0_5 = arith.constant 0 : index
    %5 = vector.load %arg2[%c0_4, %c0_5] : memref<8x16xf32, #tpu.memory_space<vmem>>, vector<8x16xf32>
    %6 = vector.shape_cast %5 : vector<8x16xf32> to vector<1x8x16xf32>
    %7 = vector.shape_cast %6 : vector<1x8x16xf32> to vector<1x8x16xf32>
    %8 = vector.broadcast %7 : vector<1x8x16xf32> to vector<8x8x16xf32>
    "tpu.trace_start"() <{level = 10 : i32, message = "toh,thv->tov"}> : () -> ()
    %cst_6 = arith.constant dense<0.000000e+00> : vector<8x8x8xf32>
    %9 = tpu.matmul %8, %4, %cst_6 {dimension_numbers = #tpu.dot_dimension_numbers<[2], [1], [1], [2], [0, 0, 0, 1, 1, 2], [0], [0]>} : vector<8x8x16xf32>, vector<8x16x8xf32>, vector<8x8x8xf32> -> vector<8x8x8xf32>
    "tpu.trace_stop"() : () -> ()
    %c0_7 = arith.constant 0 : index
    %c0_8 = arith.constant 0 : index
    %c0_9 = arith.constant 0 : index
    %10 = vector.load %arg4[%c0_7, %c0_8, %c0_9] : memref<8x8x8xf32, #tpu.memory_space<vmem>>, vector<8x8x8xf32>
    tpu.vector_store %arg4[%c0_7, %c0_8, %c0_9], %9 {strides = array<i32>} : memref<8x8x8xf32, #tpu.memory_space<vmem>>, vector<8x8x8xf32>,
    return
  }
  func.func @transform_0(%arg0: i32) -> (i32, i32, i32) {
    %c0_i32 = arith.constant 0 : i32
    %c0_i32_0 = arith.constant 0 : i32
    %c0_i32_1 = arith.constant 0 : i32
    return %arg0, %c0_i32, %c0_i32_0 : i32, i32, i32
  }
  func.func @transform_1(%arg0: i32) -> (i32, i32) {
    %c0_i32 = arith.constant 0 : i32
    %c0_i32_0 = arith.constant 0 : i32
    %c0_i32_1 = arith.constant 0 : i32
    return %c0_i32, %c0_i32_0 : i32, i32
  }
  func.func @transform_2(%arg0: i32) -> (i32, i32) {
    %c0_i32 = arith.constant 0 : i32
    %c0_i32_0 = arith.constant 0 : i32
    %c0_i32_1 = arith.constant 0 : i32
    return %c0_i32, %c0_i32_0 : i32, i32
  }
  func.func @transform_3(%arg0: i32) -> (i32, i32, i32) {
    %c0_i32 = arith.constant 0 : i32
    %c0_i32_0 = arith.constant 0 : i32
    %c0_i32_1 = arith.constant 0 : i32
    return %arg0, %c0_i32, %c0_i32_0 : i32, i32, i32
  }
}

</mosaic_0001>

<llo_original>
// kernel: video_downsize.1
$region0: #{video_downsize.1}
  #allocation0 [shape = 'u32[]', space=smem, size = 0x4, offset = 0x4, fixed_abs, tag = 'smem constant byte address 0x4 - core index']
  #allocation1 [shape = 'u32[144,128]{1,0:T(1,128)}', space=vmem, size = 0x12000, scoped, tag = 'internal scratch']
  %s0 = inlined_call_operand.hbm [shape: f32[16,16,16], index: 0, kind: input, shape index: {}]
  %s1 = inlined_call_operand.hbm [shape: f32[8,16], index: 1, kind: input, shape index: {}]
  %s2 = inlined_call_operand.hbm [shape: f32[16,8], index: 2, kind: input, shape index: {}]
  %s3 = inlined_call_operand.hbm [shape: f32[16,8,8], index: 3, kind: output, shape index: {}]
  %s4 = sld [smem:[#allocation0]]
  $region57: #{video_downsize.1} parent=0
    _
  %s6 = ssub.s32 1, %s4
  %s7 = scalar_select 0, %s6, %s4
  $region1: #{video_downsize.1} parent=0
    #allocation2 [shape = 'u8[131072]{0}', space=vmem, size = 0x20000, scoped, tag = 'input window, operand 0']
    #allocation3 [shape = 's32[2]{0}', space=sflag, size = 0x8, scoped, tag = 'scoped memory for video_downsize.1']
    #allocation4 [shape = 's32[2]{0}', space=sflag, size = 0x8, scoped, tag = 'scoped memory for video_downsize.1']
    #allocation5 [shape = 'u8[4096]{0}', space=vmem, size = 0x1000, scoped, tag = 'input window, operand 1, single buffered']
    #allocation6 [shape = 's32[1]{0}', space=sflag, size = 0x4, scoped, tag = 'scoped memory for video_downsize.1']
    #allocation7 [shape = 'u8[8192]{0}', space=vmem, size = 0x2000, scoped, tag = 'input window, operand 2, single buffered']
    #allocation8 [shape = 'u8[65536]{0}', space=vmem, size = 0x10000, scoped, tag = 'output window, operand 0']
    %8 = vsyncpa [#allocation3], 0
    %s9 = scalar_lea.sflag [#allocation3], 1
    %10 = vsyncpa %s9, 0
    %11 = vsyncpa [#allocation6], 0
    %12 = vsyncpa [#allocation4], 0
    %s13 = scalar_lea.sflag [#allocation4], 1
    %14 = vsyncpa %s13, 0
    loop: start=0, step=1, limit=4
    $region2: #{video_downsize.1} parent=1 // loop_pre_header
      _
    $region3: #{video_downsize.1} parent=1 // loop_header
      %s16 = sphi 0, %s20
      %p17 = scmp.ge.s32.totalorder %s16, 4
      %s26 = sphi 0, %s28
      %s29 = sphi 0, %s26
      %s30 = sphi 0, %s29
      %s46 = sphi 0, %s30
      %s50 = sphi 0, %s50
      %s52 = sphi 0, %s50
      %s53 = sphi 0, %s52
      %s67 = sphi 0, %s53
      %s71 = sphi 0, %s71
      %s73 = sphi 0, %s71
      %s74 = sphi 0, %s73
      %s88 = sphi 0, %s74
      %s94 = sphi 0, %s96
      %s97 = sphi 0, %s94
      %s98 = sphi 0, %s97
      %s114 = sphi 0, %s98
    $region4: #{video_downsize.1} parent=1 // loop_header_branch
      %19 = sbr.rel (%p17) target = $region8
    $region5: #{video_downsize.1} parent=1 // loop_body
      %s21 = ssub.s32 %s16, 1
      %s22 = ssub.s32 %s16, 2
      %s23 = sadd.s32 %s16, 1
      %s24 = ssub.s32 %s16, %s23
      %p25 = scmp.eq.s32.totalorder %s24, 0
      %s27 = sadd.s32 %s26, 1
      %s28 = scalar_select %p25, %s26, %s27
      %p31 = pneg %p25
      %p32 = scmp.eq.s32.totalorder %s16, 1
      %p33 = por %p31, %p32
      %p34 = scmp.ne.s32.totalorder %s26, %s29
      %p35 = scmp.eq.s32.totalorder %s16, 0
      %p36 = por %p34, %p35
      %p37 = scmp.ne.s32.totalorder %s26, %s29
      %p38 = scmp.eq.s32.totalorder %s21, 1
      %p39 = por %p37, %p38
      %p40 = scmp.ne.s32.totalorder %s29, %s30
      %p41 = scmp.eq.s32.totalorder %s21, 0
      %p42 = por %p40, %p41
      %p43 = scmp.ne.s32.totalorder %s29, %s30
      %p44 = scmp.eq.s32.totalorder %s22, 1
      %p45 = por %p43, %p44
      %p47 = scmp.ne.s32.totalorder %s30, %s46
      %p48 = scmp.eq.s32.totalorder %s22, 0
      %p49 = por %p47, %p48
      %s51 = sadd.s32 %s50, 1
      %p54 = scmp.eq.s32.totalorder %s16, 1
      %p55 = scmp.ne.s32.totalorder %s50, %s52
      %p56 = scmp.eq.s32.totalorder %s16, 0
      %p57 = por %p55, %p56
      %p58 = scmp.ne.s32.totalorder %s50, %s52
      %p59 = scmp.eq.s32.totalorder %s21, 1
      %p60 = por %p58, %p59
      %p61 = scmp.ne.s32.totalorder %s52, %s53
      %p62 = scmp.eq.s32.totalorder %s21, 0
      %p63 = por %p61, %p62
      %p64 = scmp.ne.s32.totalorder %s52, %s53
      %p65 = scmp.eq.s32.totalorder %s22, 1
      %p66 = por %p64, %p65
      %p68 = scmp.ne.s32.totalorder %s53, %s67
      %p69 = scmp.eq.s32.totalorder %s22, 0
      %p70 = por %p68, %p69
      %s72 = sadd.s32 %s71, 1
      %p75 = scmp.eq.s32.totalorder %s16, 1
      %p76 = scmp.ne.s32.totalorder %s71, %s73
      %p77 = scmp.eq.s32.totalorder %s16, 0
      %p78 = por %p76, %p77
      %p79 = scmp.ne.s32.totalorder %s71, %s73
      %p80 = scmp.eq.s32.totalorder %s21, 1
      %p81 = por %p79, %p80
      %p82 = scmp.ne.s32.totalorder %s73, %s74
      %p83 = scmp.eq.s32.totalorder %s21, 0
      %p84 = por %p82, %p83
      %p85 = scmp.ne.s32.totalorder %s73, %s74
      %p86 = scmp.eq.s32.totalorder %s22, 1
      %p87 = por %p85, %p86
      %p89 = scmp.ne.s32.totalorder %s74, %s88
      %p90 = scmp.eq.s32.totalorder %s22, 0
      %p91 = por %p89, %p90
      %s92 = ssub.s32 %s16, %s23
      %p93 = scmp.eq.s32.totalorder %s92, 0
      %s95 = sadd.s32 %s94, 1
      %s96 = scalar_select %p93, %s94, %s95
      %p99 = pneg %p93
      %p100 = scmp.eq.s32.totalorder %s16, 1
      %p101 = por %p99, %p100
      %p102 = scmp.ne.s32.totalorder %s94, %s97
      %p103 = scmp.eq.s32.totalorder %s16, 0
      %p104 = por %p102, %p103
      %p105 = scmp.ne.s32.totalorder %s94, %s97
      %p106 = scmp.eq.s32.totalorder %s21, 1
      %p107 = por %p105, %p106
      %p108 = scmp.ne.s32.totalorder %s97, %s98
      %p109 = scmp.eq.s32.totalorder %s21, 0
      %p110 = por %p108, %p109
      %p111 = scmp.ne.s32.totalorder %s97, %s98
      %p112 = scmp.eq.s32.totalorder %s22, 1
      %p113 = por %p111, %p112
      %p115 = scmp.ne.s32.totalorder %s98, %s114
      %p116 = scmp.eq.s32.totalorder %s22, 0
      %p117 = por %p115, %p116
      %p118 = scmp.le.s32.totalorder 1, %s16
      %p119 = scmp.lt.s32.totalorder %s16, 3
      %p120 = pnand %p118, %p119
      %p121 = pneg %p120
      // Predicated region
      $region9: #{video_downsize.1} parent=5 // pred_check
        _
      $region10: #{video_downsize.1} parent=5 // pred_check_branch
        %123 = sbr.rel (%p120) target = $region12
      $region11: #{video_downsize.1} parent=5 // pred_region
        %s124 = ssub.s32 %s16, 1
        // Predicated region
        $region13: #{video_downsize.1} parent=11 // pred_check
          %p125 = pneg %p63
        $region14: #{video_downsize.1} parent=11 // pred_check_branch
          %127 = sbr.rel (%p125) target = $region16
        $region15: #{video_downsize.1} parent=11 // pred_region
          %s129 = ssub.s32 128, 128
          %130 = vsyncadd [#allocation6], %s129
          %s132 = sshll.u32 [#allocation5], 4
          %s133 = int_to_ptr.vmem [resolvable:$true] %s132
          %135 = dma.hbm_to_vmem [thread:$0]  %s1, 128, %s133, [#allocation6]
        $region16: #{video_downsize.1} parent=11 // pred_fallthru
          _
        // Predicated region
        $region17: #{video_downsize.1} parent=11 // pred_check
          %p136 = pneg %p84
        $region18: #{video_downsize.1} parent=11 // pred_check_branch
          %138 = sbr.rel (%p136) target = $region20
        $region19: #{video_downsize.1} parent=11 // pred_region
          %s140 = ssub.s32 256, 256
          %141 = vsyncadd [#allocation6], %s140
          %s142 = sshll.u32 [#allocation7], 4
          %s143 = int_to_ptr.vmem [resolvable:$true] %s142
          %148 = dma.hbm_to_vmem [thread:$0]  %s2, 256, %s143, [#allocation6], 128, 128, 8
        $region20: #{video_downsize.1} parent=11 // pred_fallthru
          _
      $region12: #{video_downsize.1} parent=5 // pred_fallthru
        _
      %p149 = scmp.lt.s32.totalorder %s16, 2
      // Predicated region
      $region21: #{video_downsize.1} parent=5 // pred_check
        %p150 = pneg %p149
      $region22: #{video_downsize.1} parent=5 // pred_check_branch
        %152 = sbr.rel (%p150) target = $region24
      $region23: #{video_downsize.1} parent=5 // pred_region
        // Predicated region
        $region25: #{video_downsize.1} parent=23 // pred_check
          %p153 = pneg %p36
        $region26: #{video_downsize.1} parent=23 // pred_check_branch
          %155 = sbr.rel (%p153) target = $region28
        $region27: #{video_downsize.1} parent=23 // pred_region
          %s156 = sand.u32 %s26, 1
          %s157 = scalar_lea.sflag [#allocation3], %s156
          %s158 = sand.u32 %s26, 1
          %s159 = smul.addr %s158, 128
          %s160 = scalar_lea.vmem [#allocation2], %s159
          %s161 = smul.u32 8, %s16
          %s163 = ssub.s32 2048, 2048
          %164 = vsyncadd %s157, %s163
          %s165 = smul.addr %s161, 2
          %s166 = smul.addr %s165, 128
          %s167 = scalar_lea.hbm %s0, %s166
          %s168 = sshll.u32 %s160, 4
          %s169 = int_to_ptr.vmem [resolvable:$true] %s168
          %174 = dma.hbm_to_vmem [thread:$0]  %s167, 2048, %s169, %s157, 128, 128, 8
        $region28: #{video_downsize.1} parent=23 // pred_fallthru
          _
      $region24: #{video_downsize.1} parent=5 // pred_fallthru
        _
      %p175 = scmp.le.s32.totalorder 1, %s16
      %p176 = scmp.lt.s32.totalorder %s16, 3
      %p177 = pnand %p175, %p176
      %p178 = pneg %p177
      // Predicated region
      $region29: #{video_downsize.1} parent=5 // pred_check
        _
      $region30: #{video_downsize.1} parent=5 // pred_check_branch
        %180 = sbr.rel (%p177) target = $region32
      $region31: #{video_downsize.1} parent=5 // pred_region
        %s181 = ssub.s32 %s16, 1
        %s182 = sand.u32 %s29, 1
        %s183 = scalar_lea.sflag [#allocation3], %s182
        %s184 = sand.u32 %s29, 1
        %s185 = smul.addr %s184, 128
        %s186 = scalar_lea.vmem [#allocation2], %s185
        // Predicated region
        $region33: #{video_downsize.1} parent=31 // pred_check
          %p187 = pneg %p42
        $region34: #{video_downsize.1} parent=31 // pred_check_branch
          %189 = sbr.rel (%p187) target = $region36
        $region35: #{video_downsize.1} parent=31 // pred_region
          %190 = dma.done %s183, 2048
        $region36: #{video_downsize.1} parent=31 // pred_fallthru
          _
        // Predicated region
        $region37: #{video_downsize.1} parent=31 // pred_check
          %p191 = pneg %p63
        $region38: #{video_downsize.1} parent=31 // pred_check_branch
          %193 = sbr.rel (%p191) target = $region40
        $region39: #{video_downsize.1} parent=31 // pred_region
          %194 = dma.done [#allocation6], 128
        $region40: #{video_downsize.1} parent=31 // pred_fallthru
          _
        // Predicated region
        $region41: #{video_downsize.1} parent=31 // pred_check
          %p195 = pneg %p84
        $region42: #{video_downsize.1} parent=31 // pred_check_branch
          %197 = sbr.rel (%p195) target = $region44
        $region43: #{video_downsize.1} parent=31 // pred_region
          %198 = dma.done [#allocation6], 256
        $region44: #{video_downsize.1} parent=31 // pred_fallthru
          _
        %s199 = sand.u32 %s29, 1
        %s200 = scalar_lea.sflag [#allocation3], %s199
        %s201 = sand.u32 %s29, 1
        %s202 = smul.addr %s201, 128
        %s203 = scalar_lea.vmem [#allocation2], %s202
        %p204 = pneg %p42
        %p205 = pneg %p39
        %p206 = pneg %p63
        %p207 = pneg %p60
        %p208 = pneg %p84
        %p209 = pneg %p81
        %p210 = pneg %p110
        %p211 = pneg %p107
        %s212 = sand.u32 %s97, 1
        %s213 = scalar_lea.sflag [#allocation4], %s212
        %s214 = sand.u32 %s97, 1
        %s215 = smul.addr %s214, 64
        %s216 = scalar_lea.vmem [#allocation8], %s215
        %s217 = smul.u32 8, %s21
        %s218 = smul.u32 8, %s21
        %v219 = vld [vmem:[%s186] sm:$0xff]
        %v220 = vld [vmem:[%s186 + $0x8] sm:$0xff]
        %v221 = vld [vmem:[%s186 + $0x10] sm:$0xff]
        %v222 = vld [vmem:[%s186 + $0x18] sm:$0xff]
        %v223 = vld [vmem:[%s186 + $0x20] sm:$0xff]
        %v224 = vld [vmem:[%s186 + $0x28] sm:$0xff]
        %v225 = vld [vmem:[%s186 + $0x30] sm:$0xff]
        %v226 = vld [vmem:[%s186 + $0x38] sm:$0xff]
        %v227 = vld [vmem:[%s186 + $0x40] sm:$0xff]
        %v228 = vld [vmem:[%s186 + $0x48] sm:$0xff]
        %v229 = vld [vmem:[%s186 + $0x50] sm:$0xff]
        %v230 = vld [vmem:[%s186 + $0x58] sm:$0xff]
        %v231 = vld [vmem:[%s186 + $0x60] sm:$0xff]
        %v232 = vld [vmem:[%s186 + $0x68] sm:$0xff]
        %v233 = vld [vmem:[%s186 + $0x70] sm:$0xff]
        %v234 = vld [vmem:[%s186 + $0x78] sm:$0xff]
        %v235 = vld [vmem:[#allocation7] sm:$0xff]
        %v236 = vld [vmem:[#allocation7 + $0x8] sm:$0xff]
        %vm237 = vcmask 130048
        %v239 = vsel %vm237, %v219, 0
        %v242 = vsel %vm237, %v220, 0
        %v245 = vsel %vm237, %v221, 0
        %v248 = vsel %vm237, %v222, 0
        %v251 = vsel %vm237, %v223, 0
        %v254 = vsel %vm237, %v224, 0
        %v257 = vsel %vm237, %v225, 0
        %v260 = vsel %vm237, %v226, 0
        %v263 = vsel %vm237, %v227, 0
        %v266 = vsel %vm237, %v228, 0
        %v269 = vsel %vm237, %v229, 0
        %v272 = vsel %vm237, %v230, 0
        %v275 = vsel %vm237, %v231, 0
        %v278 = vsel %vm237, %v232, 0
        %v281 = vsel %vm237, %v233, 0
        %v284 = vsel %vm237, %v234, 0
        %286 = vmatprep.subr.mxu0 0.0
        %287 = vmatpush1.msra.mxu0 0.0
        %288 = vmatprep.subr.mxu0 0.0
        %289 = vmatpush1.msra.mxu0 0.0
        %290 = vmatprep.subr.mxu0 0.0
        %291 = vmatpush1.msra.mxu0 0.0
        %292 = vmatprep.subr.mxu0 0.0
        %293 = vmatpush1.msra.mxu0 0.0
        %294 = vmatprep.subr.mxu0 0.0
        %295 = vmatpush1.msra.mxu0 0.0
        %296 = vmatprep.subr.mxu0 0.0
        %297 = vmatpush1.msra.mxu0 0.0
        %298 = vmatprep.subr.mxu0 0.0
        %299 = vmatpush1.msra.mxu0 0.0
        %300 = vmatprep.subr.mxu0 0.0
        %301 = vmatpush1.msra.mxu0 0.0
        %302 = vmatprep.subr.mxu0 0.0
        %303 = vmatpush1.msra.mxu0 0.0
        %304 = vmatprep.subr.mxu0 0.0
        %305 = vmatpush1.msra.mxu0 0.0
        %306 = vmatprep.subr.mxu0 0.0
        %307 = vmatpush1.msra.mxu0 0.0
        %308 = vmatprep.subr.mxu0 0.0
        %309 = vmatpush1.msra.mxu0 0.0
        %310 = vmatprep.subr.mxu0 0.0
        %311 = vmatpush1.msra.mxu0 0.0
        %312 = vmatprep.subr.mxu0 0.0
        %313 = vmatpush1.msra.mxu0 0.0
        %314 = vmatprep.subr.mxu0 0.0
        %315 = vmatpush1.msra.mxu0 %v236
        %316 = vmatprep.subr.mxu0 0.0
        %317 = vmatpush1.msra.mxu0 %v235
        %318 = vmatprep.subr.mxu0 0.0
        %319 = vmatpush2.msra.mxu0 0.0
        %320 = vmatprep.subr.mxu0 0.0
        %321 = vmatpush2.msra.mxu0 0.0
        %322 = vmatprep.subr.mxu0 0.0
        %323 = vmatpush2.msra.mxu0 0.0
        %324 = vmatprep.subr.mxu0 0.0
        %325 = vmatpush2.msra.mxu0 0.0
        %326 = vmatprep.subr.mxu0 0.0
        %327 = vmatpush2.msra.mxu0 0.0
        %328 = vmatprep.subr.mxu0 0.0
        %329 = vmatpush2.msra.mxu0 0.0
        %330 = vmatprep.subr.mxu0 0.0
        %331 = vmatpush2.msra.mxu0 0.0
        %332 = vmatprep.subr.mxu0 0.0
        %333 = vmatpush2.msra.mxu0 0.0
        %334 = vmatprep.subr.mxu0 0.0
        %335 = vmatpush2.msra.mxu0 0.0
        %336 = vmatprep.subr.mxu0 0.0
        %337 = vmatpush2.msra.mxu0 0.0
        %338 = vmatprep.subr.mxu0 0.0
        %339 = vmatpush2.msra.mxu0 0.0
        %340 = vmatprep.subr.mxu0 0.0
        %341 = vmatpush2.msra.mxu0 0.0
        %342 = vmatprep.subr.mxu0 0.0
        %343 = vmatpush2.msra.mxu0 0.0
        %344 = vmatprep.subr.mxu0 0.0
        %345 = vmatpush2.msra.mxu0 0.0
        %346 = vmatprep.subr.mxu0 0.0
        %347 = vmatpush2.msra.mxu0 0.0
        %348 = vmatprep.subr.mxu0 0.0
        %349 = vmatpush2.msra.mxu0 0.0
        %350 = vmatprep.mubr.f32.mxu0 0.0
        %351 = vmatmul.mubr.f32.gmra.mxu0 %v239
        %v352 = vpop.f32.mrf.mxu0
        %v353 = vadd.f32 0.0, %v352
        %v354 = vpop.f32.mrf.mxu0
        %355 = vmatprep.mubr.f32.mxu0 0.0
        %356 = vmatmul.mubr.f32.gmra.mxu0 %v242
        %v357 = vpop.f32.mrf.mxu0
        %v358 = vadd.f32 0.0, %v357
        %v359 = vpop.f32.mrf.mxu0
        %360 = vmatprep.mubr.f32.mxu0 0.0
        %361 = vmatmul.mubr.f32.gmra.mxu0 %v245
        %v362 = vpop.f32.mrf.mxu0
        %v363 = vadd.f32 0.0, %v362
        %v364 = vpop.f32.mrf.mxu0
        %365 = vmatprep.mubr.f32.mxu0 0.0
        %366 = vmatmul.mubr.f32.gmra.mxu0 %v248
        %v367 = vpop.f32.mrf.mxu0
        %v368 = vadd.f32 0.0, %v367
        %v369 = vpop.f32.mrf.mxu0
        %370 = vmatprep.mubr.f32.mxu0 0.0
        %371 = vmatmul.mubr.f32.gmra.mxu0 %v251
        %v372 = vpop.f32.mrf.mxu0
        %v373 = vadd.f32 0.0, %v372
        %v374 = vpop.f32.mrf.mxu0
        %375 = vmatprep.mubr.f32.mxu0 0.0
        %376 = vmatmul.mubr.f32.gmra.mxu0 %v254
        %v377 = vpop.f32.mrf.mxu0
        %v378 = vadd.f32 0.0, %v377
        %v379 = vpop.f32.mrf.mxu0
        %380 = vmatprep.mubr.f32.mxu0 0.0
        %381 = vmatmul.mubr.f32.gmra.mxu0 %v257
        %v382 = vpop.f32.mrf.mxu0
        %v383 = vadd.f32 0.0, %v382
        %v384 = vpop.f32.mrf.mxu0
        %385 = vmatprep.mubr.f32.mxu0 0.0
        %386 = vmatmul.mubr.f32.gmra.mxu0 %v260
        %v387 = vpop.f32.mrf.mxu0
        %v388 = vadd.f32 0.0, %v387
        %v389 = vpop.f32.mrf.mxu0
        %390 = vmatprep.mubr.f32.mxu0 0.0
        %391 = vmatmul.mubr.f32.gmra.mxu0 %v263
        %v392 = vpop.f32.mrf.mxu0
        %v393 = vadd.f32 0.0, %v392
        %v394 = vpop.f32.mrf.mxu0
        %395 = vmatprep.mubr.f32.mxu0 0.0
        %396 = vmatmul.mubr.f32.gmra.mxu0 %v266
        %v397 = vpop.f32.mrf.mxu0
        %v398 = vadd.f32 0.0, %v397
        %v399 = vpop.f32.mrf.mxu0
        %400 = vmatprep.mubr.f32.mxu0 0.0
        %401 = vmatmul.mubr.f32.gmra.mxu0 %v269
        %v402 = vpop.f32.mrf.mxu0
        %v403 = vadd.f32 0.0, %v402
        %v404 = vpop.f32.mrf.mxu0
        %405 = vmatprep.mubr.f32.mxu0 0.0
        %406 = vmatmul.mubr.f32.gmra.mxu0 %v272
        %v407 = vpop.f32.mrf.mxu0
        %v408 = vadd.f32 0.0, %v407
        %v409 = vpop.f32.mrf.mxu0
        %410 = vmatprep.mubr.f32.mxu0 0.0
        %411 = vmatmul.mubr.f32.gmra.mxu0 %v275
        %v412 = vpop.f32.mrf.mxu0
        %v413 = vadd.f32 0.0, %v412
        %v414 = vpop.f32.mrf.mxu0
        %415 = vmatprep.mubr.f32.mxu0 0.0
        %416 = vmatmul.mubr.f32.gmra.mxu0 %v278
        %v417 = vpop.f32.mrf.mxu0
        %v418 = vadd.f32 0.0, %v417
        %v419 = vpop.f32.mrf.mxu0
        %420 = vmatprep.mubr.f32.mxu0 0.0
        %421 = vmatmul.mubr.f32.gmra.mxu0 %v281
        %v422 = vpop.f32.mrf.mxu0
        %v423 = vadd.f32 0.0, %v422
        %v424 = vpop.f32.mrf.mxu0
        %425 = vmatprep.mubr.f32.mxu0 0.0
        %426 = vmatmul.mubr.f32.gmra.mxu0 %v284
        %v427 = vpop.f32.mrf.mxu0
        %v428 = vadd.f32 0.0, %v427
        %v429 = vpop.f32.mrf.mxu0
        %430 = vdwg.mxu0
        %v431 = vld [vmem:[#allocation5] sm:$0xff]
        %v433 = vsel %vm237, %v431, 0
        %435 = vmatprep.subr.mxu0 0.0
        %436 = vmatpush1.msra.mxu0 0.0
        %437 = vmatprep.subr.mxu0 0.0
        %438 = vmatpush1.msra.mxu0 0.0
        %439 = vmatprep.subr.mxu0 0.0
        %440 = vmatpush1.msra.mxu0 0.0
        %441 = vmatprep.subr.mxu0 0.0
        %442 = vmatpush1.msra.mxu0 0.0
        %443 = vmatprep.subr.mxu0 0.0
        %444 = vmatpush1.msra.mxu0 0.0
        %445 = vmatprep.subr.mxu0 0.0
        %446 = vmatpush1.msra.mxu0 0.0
        %447 = vmatprep.subr.mxu0 0.0
        %448 = vmatpush1.msra.mxu0 0.0
        %449 = vmatprep.subr.mxu0 0.0
        %450 = vmatpush1.msra.mxu0 0.0
        %451 = vmatprep.subr.mxu0 0.0
        %452 = vmatpush1.msra.mxu0 0.0
        %453 = vmatprep.subr.mxu0 0.0
        %454 = vmatpush1.msra.mxu0 0.0
        %455 = vmatprep.subr.mxu0 0.0
        %456 = vmatpush1.msra.mxu0 0.0
        %457 = vmatprep.subr.mxu0 0.0
        %458 = vmatpush1.msra.mxu0 0.0
        %459 = vmatprep.subr.mxu0 0.0
        %460 = vmatpush1.msra.mxu0 0.0
        %461 = vmatprep.subr.mxu0 0.0
        %462 = vmatpush1.msra.mxu0 0.0
        %463 = vmatprep.subr.mxu0 0.0
        %464 = vmatpush1.msra.mxu0 %v358
        %465 = vmatprep.subr.mxu0 0.0
        %466 = vmatpush1.msra.mxu0 %v353
        %467 = vmatprep.subr.mxu0 0.0
        %468 = vmatpush2.msra.mxu0 0.0
        %469 = vmatprep.subr.mxu0 0.0
        %470 = vmatpush2.msra.mxu0 0.0
        %471 = vmatprep.subr.mxu0 0.0
        %472 = vmatpush2.msra.mxu0 0.0
        %473 = vmatprep.subr.mxu0 0.0
        %474 = vmatpush2.msra.mxu0 0.0
        %475 = vmatprep.subr.mxu0 0.0
        %476 = vmatpush2.msra.mxu0 0.0
        %477 = vmatprep.subr.mxu0 0.0
        %478 = vmatpush2.msra.mxu0 0.0
        %479 = vmatprep.subr.mxu0 0.0
        %480 = vmatpush2.msra.mxu0 0.0
        %481 = vmatprep.subr.mxu0 0.0
        %482 = vmatpush2.msra.mxu0 0.0
        %483 = vmatprep.subr.mxu0 0.0
        %484 = vmatpush2.msra.mxu0 0.0
        %485 = vmatprep.subr.mxu0 0.0
        %486 = vmatpush2.msra.mxu0 0.0
        %487 = vmatprep.subr.mxu0 0.0
        %488 = vmatpush2.msra.mxu0 0.0
        %489 = vmatprep.subr.mxu0 0.0
        %490 = vmatpush2.msra.mxu0 0.0
        %491 = vmatprep.subr.mxu0 0.0
        %492 = vmatpush2.msra.mxu0 0.0
        %493 = vmatprep.subr.mxu0 0.0
        %494 = vmatpush2.msra.mxu0 0.0
        %495 = vmatprep.subr.mxu0 0.0
        %496 = vmatpush2.msra.mxu0 0.0
        %497 = vmatprep.subr.mxu0 0.0
        %498 = vmatpush2.msra.mxu0 0.0
        %499 = vmatprep.mubr.f32.mxu0 0.0
        %500 = vmatmul.mubr.f32.gmra.mxu0 %v433
        %v501 = vpop.f32.mrf.mxu0
        %v502 = vadd.f32 0.0, %v501
        %v503 = vpop.f32.mrf.mxu0
        %504 = vdwg.mxu0
        %505 = vmatprep.subr.mxu0 0.0
        %506 = vmatpush1.msra.mxu0 0.0
        %507 = vmatprep.subr.mxu0 0.0
        %508 = vmatpush1.msra.mxu0 0.0
        %509 = vmatprep.subr.mxu0 0.0
        %510 = vmatpush1.msra.mxu0 0.0
        %511 = vmatprep.subr.mxu0 0.0
        %512 = vmatpush1.msra.mxu0 0.0
        %513 = vmatprep.subr.mxu0 0.0
        %514 = vmatpush1.msra.mxu0 0.0
        %515 = vmatprep.subr.mxu0 0.0
        %516 = vmatpush1.msra.mxu0 0.0
        %517 = vmatprep.subr.mxu0 0.0
        %518 = vmatpush1.msra.mxu0 0.0
        %519 = vmatprep.subr.mxu0 0.0
        %520 = vmatpush1.msra.mxu0 0.0
        %521 = vmatprep.subr.mxu0 0.0
        %522 = vmatpush1.msra.mxu0 0.0
        %523 = vmatprep.subr.mxu0 0.0
        %524 = vmatpush1.msra.mxu0 0.0
        %525 = vmatprep.subr.mxu0 0.0
        %526 = vmatpush1.msra.mxu0 0.0
        %527 = vmatprep.subr.mxu0 0.0
        %528 = vmatpush1.msra.mxu0 0.0
        %529 = vmatprep.subr.mxu0 0.0
        %530 = vmatpush1.msra.mxu0 0.0
        %531 = vmatprep.subr.mxu0 0.0
        %532 = vmatpush1.msra.mxu0 0.0
        %533 = vmatprep.subr.mxu0 0.0
        %534 = vmatpush1.msra.mxu0 %v368
        %535 = vmatprep.subr.mxu0 0.0
        %536 = vmatpush1.msra.mxu0 %v363
        %537 = vmatprep.subr.mxu0 0.0
        %538 = vmatpush2.msra.mxu0 0.0
        %539 = vmatprep.subr.mxu0 0.0
        %540 = vmatpush2.msra.mxu0 0.0
        %541 = vmatprep.subr.mxu0 0.0
        %542 = vmatpush2.msra.mxu0 0.0
        %543 = vmatprep.subr.mxu0 0.0
        %544 = vmatpush2.msra.mxu0 0.0
        %545 = vmatprep.subr.mxu0 0.0
        %546 = vmatpush2.msra.mxu0 0.0
        %547 = vmatprep.subr.mxu0 0.0
        %548 = vmatpush2.msra.mxu0 0.0
        %549 = vmatprep.subr.mxu0 0.0
        %550 = vmatpush2.msra.mxu0 0.0
        %551 = vmatprep.subr.mxu0 0.0
        %552 = vmatpush2.msra.mxu0 0.0
        %553 = vmatprep.subr.mxu0 0.0
        %554 = vmatpush2.msra.mxu0 0.0
        %555 = vmatprep.subr.mxu0 0.0
        %556 = vmatpush2.msra.mxu0 0.0
        %557 = vmatprep.subr.mxu0 0.0
        %558 = vmatpush2.msra.mxu0 0.0
        %559 = vmatprep.subr.mxu0 0.0
        %560 = vmatpush2.msra.mxu0 0.0
        %561 = vmatprep.subr.mxu0 0.0
        %562 = vmatpush2.msra.mxu0 0.0
        %563 = vmatprep.subr.mxu0 0.0
        %564 = vmatpush2.msra.mxu0 0.0
        %565 = vmatprep.subr.mxu0 0.0
        %566 = vmatpush2.msra.mxu0 0.0
        %567 = vmatprep.subr.mxu0 0.0
        %568 = vmatpush2.msra.mxu0 0.0
        %569 = vmatprep.mubr.f32.mxu0 0.0
        %570 = vmatmul.mubr.f32.gmra.mxu0 %v433
        %v571 = vpop.f32.mrf.mxu0
        %v572 = vadd.f32 0.0, %v571
        %v573 = vpop.f32.mrf.mxu0
        %574 = vdwg.mxu0
        %575 = vmatprep.subr.mxu0 0.0
        %576 = vmatpush1.msra.mxu0 0.0
        %577 = vmatprep.subr.mxu0 0.0
        %578 = vmatpush1.msra.mxu0 0.0
        %579 = vmatprep.subr.mxu0 0.0
        %580 = vmatpush1.msra.mxu0 0.0
        %581 = vmatprep.subr.mxu0 0.0
        %582 = vmatpush1.msra.mxu0 0.0
        %583 = vmatprep.subr.mxu0 0.0
        %584 = vmatpush1.msra.mxu0 0.0
        %585 = vmatprep.subr.mxu0 0.0
        %586 = vmatpush1.msra.mxu0 0.0
        %587 = vmatprep.subr.mxu0 0.0
        %588 = vmatpush1.msra.mxu0 0.0
        %589 = vmatprep.subr.mxu0 0.0
        %590 = vmatpush1.msra.mxu0 0.0
        %591 = vmatprep.subr.mxu0 0.0
        %592 = vmatpush1.msra.mxu0 0.0
        %593 = vmatprep.subr.mxu0 0.0
        %594 = vmatpush1.msra.mxu0 0.0
        %595 = vmatprep.subr.mxu0 0.0
        %596 = vmatpush1.msra.mxu0 0.0
        %597 = vmatprep.subr.mxu0 0.0
        %598 = vmatpush1.msra.mxu0 0.0
        %599 = vmatprep.subr.mxu0 0.0
        %600 = vmatpush1.msra.mxu0 0.0
        %601 = vmatprep.subr.mxu0 0.0
        %602 = vmatpush1.msra.mxu0 0.0
        %603 = vmatprep.subr.mxu0 0.0
        %604 = vmatpush1.msra.mxu0 %v378
        %605 = vmatprep.subr.mxu0 0.0
        %606 = vmatpush1.msra.mxu0 %v373
        %607 = vmatprep.subr.mxu0 0.0
        %608 = vmatpush2.msra.mxu0 0.0
        %609 = vmatprep.subr.mxu0 0.0
        %610 = vmatpush2.msra.mxu0 0.0
        %611 = vmatprep.subr.mxu0 0.0
        %612 = vmatpush2.msra.mxu0 0.0
        %613 = vmatprep.subr.mxu0 0.0
        %614 = vmatpush2.msra.mxu0 0.0
        %615 = vmatprep.subr.mxu0 0.0
        %616 = vmatpush2.msra.mxu0 0.0
        %617 = vmatprep.subr.mxu0 0.0
        %618 = vmatpush2.msra.mxu0 0.0
        %619 = vmatprep.subr.mxu0 0.0
        %620 = vmatpush2.msra.mxu0 0.0
        %621 = vmatprep.subr.mxu0 0.0
        %622 = vmatpush2.msra.mxu0 0.0
        %623 = vmatprep.subr.mxu0 0.0
        %624 = vmatpush2.msra.mxu0 0.0
        %625 = vmatprep.subr.mxu0 0.0
        %626 = vmatpush2.msra.mxu0 0.0
        %627 = vmatprep.subr.mxu0 0.0
        %628 = vmatpush2.msra.mxu0 0.0
        %629 = vmatprep.subr.mxu0 0.0
        %630 = vmatpush2.msra.mxu0 0.0
        %631 = vmatprep.subr.mxu0 0.0
        %632 = vmatpush2.msra.mxu0 0.0
        %633 = vmatprep.subr.mxu0 0.0
        %634 = vmatpush2.msra.mxu0 0.0
        %635 = vmatprep.subr.mxu0 0.0
        %636 = vmatpush2.msra.mxu0 0.0
        %637 = vmatprep.subr.mxu0 0.0
        %638 = vmatpush2.msra.mxu0 0.0
        %639 = vmatprep.mubr.f32.mxu0 0.0
        %640 = vmatmul.mubr.f32.gmra.mxu0 %v433
        %v641 = vpop.f32.mrf.mxu0
        %v642 = vadd.f32 0.0, %v641
        %v643 = vpop.f32.mrf.mxu0
        %644 = vdwg.mxu0
        %645 = vmatprep.subr.mxu0 0.0
        %646 = vmatpush1.msra.mxu0 0.0
        %647 = vmatprep.subr.mxu0 0.0
        %648 = vmatpush1.msra.mxu0 0.0
        %649 = vmatprep.subr.mxu0 0.0
        %650 = vmatpush1.msra.mxu0 0.0
        %651 = vmatprep.subr.mxu0 0.0
        %652 = vmatpush1.msra.mxu0 0.0
        %653 = vmatprep.subr.mxu0 0.0
        %654 = vmatpush1.msra.mxu0 0.0
        %655 = vmatprep.subr.mxu0 0.0
        %656 = vmatpush1.msra.mxu0 0.0
        %657 = vmatprep.subr.mxu0 0.0
        %658 = vmatpush1.msra.mxu0 0.0
        %659 = vmatprep.subr.mxu0 0.0
        %660 = vmatpush1.msra.mxu0 0.0
        %661 = vmatprep.subr.mxu0 0.0
        %662 = vmatpush1.msra.mxu0 0.0
        %663 = vmatprep.subr.mxu0 0.0
        %664 = vmatpush1.msra.mxu0 0.0
        %665 = vmatprep.subr.mxu0 0.0
        %666 = vmatpush1.msra.mxu0 0.0
        %667 = vmatprep.subr.mxu0 0.0
        %668 = vmatpush1.msra.mxu0 0.0
        %669 = vmatprep.subr.mxu0 0.0
        %670 = vmatpush1.msra.mxu0 0.0
        %671 = vmatprep.subr.mxu0 0.0
        %672 = vmatpush1.msra.mxu0 0.0
        %673 = vmatprep.subr.mxu0 0.0
        %674 = vmatpush1.msra.mxu0 %v388
        %675 = vmatprep.subr.mxu0 0.0
        %676 = vmatpush1.msra.mxu0 %v383
        %677 = vmatprep.subr.mxu0 0.0
        %678 = vmatpush2.msra.mxu0 0.0
        %679 = vmatprep.subr.mxu0 0.0
        %680 = vmatpush2.msra.mxu0 0.0
        %681 = vmatprep.subr.mxu0 0.0
        %682 = vmatpush2.msra.mxu0 0.0
        %683 = vmatprep.subr.mxu0 0.0
        %684 = vmatpush2.msra.mxu0 0.0
        %685 = vmatprep.subr.mxu0 0.0
        %686 = vmatpush2.msra.mxu0 0.0
        %687 = vmatprep.subr.mxu0 0.0
        %688 = vmatpush2.msra.mxu0 0.0
        %689 = vmatprep.subr.mxu0 0.0
        %690 = vmatpush2.msra.mxu0 0.0
        %691 = vmatprep.subr.mxu0 0.0
        %692 = vmatpush2.msra.mxu0 0.0
        %693 = vmatprep.subr.mxu0 0.0
        %694 = vmatpush2.msra.mxu0 0.0
        %695 = vmatprep.subr.mxu0 0.0
        %696 = vmatpush2.msra.mxu0 0.0
        %697 = vmatprep.subr.mxu0 0.0
        %698 = vmatpush2.msra.mxu0 0.0
        %699 = vmatprep.subr.mxu0 0.0
        %700 = vmatpush2.msra.mxu0 0.0
        %701 = vmatprep.subr.mxu0 0.0
        %702 = vmatpush2.msra.mxu0 0.0
        %703 = vmatprep.subr.mxu0 0.0
        %704 = vmatpush2.msra.mxu0 0.0
        %705 = vmatprep.subr.mxu0 0.0
        %706 = vmatpush2.msra.mxu0 0.0
        %707 = vmatprep.subr.mxu0 0.0
        %708 = vmatpush2.msra.mxu0 0.0
        %709 = vmatprep.mubr.f32.mxu0 0.0
        %710 = vmatmul.mubr.f32.gmra.mxu0 %v433
        %v711 = vpop.f32.mrf.mxu0
        %v712 = vadd.f32 0.0, %v711
        %v713 = vpop.f32.mrf.mxu0
        %714 = vdwg.mxu0
        %715 = vmatprep.subr.mxu0 0.0
        %716 = vmatpush1.msra.mxu0 0.0
        %717 = vmatprep.subr.mxu0 0.0
        %718 = vmatpush1.msra.mxu0 0.0
        %719 = vmatprep.subr.mxu0 0.0
        %720 = vmatpush1.msra.mxu0 0.0
        %721 = vmatprep.subr.mxu0 0.0
        %722 = vmatpush1.msra.mxu0 0.0
        %723 = vmatprep.subr.mxu0 0.0
        %724 = vmatpush1.msra.mxu0 0.0
        %725 = vmatprep.subr.mxu0 0.0
        %726 = vmatpush1.msra.mxu0 0.0
        %727 = vmatprep.subr.mxu0 0.0
        %728 = vmatpush1.msra.mxu0 0.0
        %729 = vmatprep.subr.mxu0 0.0
        %730 = vmatpush1.msra.mxu0 0.0
        %731 = vmatprep.subr.mxu0 0.0
        %732 = vmatpush1.msra.mxu0 0.0
        %733 = vmatprep.subr.mxu0 0.0
        %734 = vmatpush1.msra.mxu0 0.0
        %735 = vmatprep.subr.mxu0 0.0
        %736 = vmatpush1.msra.mxu0 0.0
        %737 = vmatprep.subr.mxu0 0.0
        %738 = vmatpush1.msra.mxu0 0.0
        %739 = vmatprep.subr.mxu0 0.0
        %740 = vmatpush1.msra.mxu0 0.0
        %741 = vmatprep.subr.mxu0 0.0
        %742 = vmatpush1.msra.mxu0 0.0
        %743 = vmatprep.subr.mxu0 0.0
        %744 = vmatpush1.msra.mxu0 %v398
        %745 = vmatprep.subr.mxu0 0.0
        %746 = vmatpush1.msra.mxu0 %v393
        %747 = vmatprep.subr.mxu0 0.0
        %748 = vmatpush2.msra.mxu0 0.0
        %749 = vmatprep.subr.mxu0 0.0
        %750 = vmatpush2.msra.mxu0 0.0
        %751 = vmatprep.subr.mxu0 0.0
        %752 = vmatpush2.msra.mxu0 0.0
        %753 = vmatprep.subr.mxu0 0.0
        %754 = vmatpush2.msra.mxu0 0.0
        %755 = vmatprep.subr.mxu0 0.0
        %756 = vmatpush2.msra.mxu0 0.0
        %757 = vmatprep.subr.mxu0 0.0
        %758 = vmatpush2.msra.mxu0 0.0
        %759 = vmatprep.subr.mxu0 0.0
        %760 = vmatpush2.msra.mxu0 0.0
        %761 = vmatprep.subr.mxu0 0.0
        %762 = vmatpush2.msra.mxu0 0.0
        %763 = vmatprep.subr.mxu0 0.0
        %764 = vmatpush2.msra.mxu0 0.0
        %765 = vmatprep.subr.mxu0 0.0
        %766 = vmatpush2.msra.mxu0 0.0
        %767 = vmatprep.subr.mxu0 0.0
        %768 = vmatpush2.msra.mxu0 0.0
        %769 = vmatprep.subr.mxu0 0.0
        %770 = vmatpush2.msra.mxu0 0.0
        %771 = vmatprep.subr.mxu0 0.0
        %772 = vmatpush2.msra.mxu0 0.0
        %773 = vmatprep.subr.mxu0 0.0
        %774 = vmatpush2.msra.mxu0 0.0
        %775 = vmatprep.subr.mxu0 0.0
        %776 = vmatpush2.msra.mxu0 0.0
        %777 = vmatprep.subr.mxu0 0.0
        %778 = vmatpush2.msra.mxu0 0.0
        %779 = vmatprep.mubr.f32.mxu0 0.0
        %780 = vmatmul.mubr.f32.gmra.mxu0 %v433
        %v781 = vpop.f32.mrf.mxu0
        %v782 = vadd.f32 0.0, %v781
        %v783 = vpop.f32.mrf.mxu0
        %784 = vdwg.mxu0
        %785 = vmatprep.subr.mxu0 0.0
        %786 = vmatpush1.msra.mxu0 0.0
        %787 = vmatprep.subr.mxu0 0.0
        %788 = vmatpush1.msra.mxu0 0.0
        %789 = vmatprep.subr.mxu0 0.0
        %790 = vmatpush1.msra.mxu0 0.0
        %791 = vmatprep.subr.mxu0 0.0
        %792 = vmatpush1.msra.mxu0 0.0
        %793 = vmatprep.subr.mxu0 0.0
        %794 = vmatpush1.msra.mxu0 0.0
        %795 = vmatprep.subr.mxu0 0.0
        %796 = vmatpush1.msra.mxu0 0.0
        %797 = vmatprep.subr.mxu0 0.0
        %798 = vmatpush1.msra.mxu0 0.0
        %799 = vmatprep.subr.mxu0 0.0
        %800 = vmatpush1.msra.mxu0 0.0
        %801 = vmatprep.subr.mxu0 0.0
        %802 = vmatpush1.msra.mxu0 0.0
        %803 = vmatprep.subr.mxu0 0.0
        %804 = vmatpush1.msra.mxu0 0.0
        %805 = vmatprep.subr.mxu0 0.0
        %806 = vmatpush1.msra.mxu0 0.0
        %807 = vmatprep.subr.mxu0 0.0
        %808 = vmatpush1.msra.mxu0 0.0
        %809 = vmatprep.subr.mxu0 0.0
        %810 = vmatpush1.msra.mxu0 0.0
        %811 = vmatprep.subr.mxu0 0.0
        %812 = vmatpush1.msra.mxu0 0.0
        %813 = vmatprep.subr.mxu0 0.0
        %814 = vmatpush1.msra.mxu0 %v408
        %815 = vmatprep.subr.mxu0 0.0
        %816 = vmatpush1.msra.mxu0 %v403
        %817 = vmatprep.subr.mxu0 0.0
        %818 = vmatpush2.msra.mxu0 0.0
        %819 = vmatprep.subr.mxu0 0.0
        %820 = vmatpush2.msra.mxu0 0.0
        %821 = vmatprep.subr.mxu0 0.0
        %822 = vmatpush2.msra.mxu0 0.0
        %823 = vmatprep.subr.mxu0 0.0
        %824 = vmatpush2.msra.mxu0 0.0
        %825 = vmatprep.subr.mxu0 0.0
        %826 = vmatpush2.msra.mxu0 0.0
        %827 = vmatprep.subr.mxu0 0.0
        %828 = vmatpush2.msra.mxu0 0.0
        %829 = vmatprep.subr.mxu0 0.0
        %830 = vmatpush2.msra.mxu0 0.0
        %831 = vmatprep.subr.mxu0 0.0
        %832 = vmatpush2.msra.mxu0 0.0
        %833 = vmatprep.subr.mxu0 0.0
        %834 = vmatpush2.msra.mxu0 0.0
        %835 = vmatprep.subr.mxu0 0.0
        %836 = vmatpush2.msra.mxu0 0.0
        %837 = vmatprep.subr.mxu0 0.0
        %838 = vmatpush2.msra.mxu0 0.0
        %839 = vmatprep.subr.mxu0 0.0
        %840 = vmatpush2.msra.mxu0 0.0
        %841 = vmatprep.subr.mxu0 0.0
        %842 = vmatpush2.msra.mxu0 0.0
        %843 = vmatprep.subr.mxu0 0.0
        %844 = vmatpush2.msra.mxu0 0.0
        %845 = vmatprep.subr.mxu0 0.0
        %846 = vmatpush2.msra.mxu0 0.0
        %847 = vmatprep.subr.mxu0 0.0
        %848 = vmatpush2.msra.mxu0 0.0
        %849 = vmatprep.mubr.f32.mxu0 0.0
        %850 = vmatmul.mubr.f32.gmra.mxu0 %v433
        %v851 = vpop.f32.mrf.mxu0
        %v852 = vadd.f32 0.0, %v851
        %v853 = vpop.f32.mrf.mxu0
        %854 = vdwg.mxu0
        %855 = vmatprep.subr.mxu0 0.0
        %856 = vmatpush1.msra.mxu0 0.0
        %857 = vmatprep.subr.mxu0 0.0
        %858 = vmatpush1.msra.mxu0 0.0
        %859 = vmatprep.subr.mxu0 0.0
        %860 = vmatpush1.msra.mxu0 0.0
        %861 = vmatprep.subr.mxu0 0.0
        %862 = vmatpush1.msra.mxu0 0.0
        %863 = vmatprep.subr.mxu0 0.0
        %864 = vmatpush1.msra.mxu0 0.0
        %865 = vmatprep.subr.mxu0 0.0
        %866 = vmatpush1.msra.mxu0 0.0
        %867 = vmatprep.subr.mxu0 0.0
        %868 = vmatpush1.msra.mxu0 0.0
        %869 = vmatprep.subr.mxu0 0.0
        %870 = vmatpush1.msra.mxu0 0.0
        %871 = vmatprep.subr.mxu0 0.0
        %872 = vmatpush1.msra.mxu0 0.0
        %873 = vmatprep.subr.mxu0 0.0
        %874 = vmatpush1.msra.mxu0 0.0
        %875 = vmatprep.subr.mxu0 0.0
        %876 = vmatpush1.msra.mxu0 0.0
        %877 = vmatprep.subr.mxu0 0.0
        %878 = vmatpush1.msra.mxu0 0.0
        %879 = vmatprep.subr.mxu0 0.0
        %880 = vmatpush1.msra.mxu0 0.0
        %881 = vmatprep.subr.mxu0 0.0
        %882 = vmatpush1.msra.mxu0 0.0
        %883 = vmatprep.subr.mxu0 0.0
        %884 = vmatpush1.msra.mxu0 %v418
        %885 = vmatprep.subr.mxu0 0.0
        %886 = vmatpush1.msra.mxu0 %v413
        %887 = vmatprep.subr.mxu0 0.0
        %888 = vmatpush2.msra.mxu0 0.0
        %889 = vmatprep.subr.mxu0 0.0
        %890 = vmatpush2.msra.mxu0 0.0
        %891 = vmatprep.subr.mxu0 0.0
        %892 = vmatpush2.msra.mxu0 0.0
        %893 = vmatprep.subr.mxu0 0.0
        %894 = vmatpush2.msra.mxu0 0.0
        %895 = vmatprep.subr.mxu0 0.0
        %896 = vmatpush2.msra.mxu0 0.0
        %897 = vmatprep.subr.mxu0 0.0
        %898 = vmatpush2.msra.mxu0 0.0
        %899 = vmatprep.subr.mxu0 0.0
        %900 = vmatpush2.msra.mxu0 0.0
        %901 = vmatprep.subr.mxu0 0.0
        %902 = vmatpush2.msra.mxu0 0.0
        %903 = vmatprep.subr.mxu0 0.0
        %904 = vmatpush2.msra.mxu0 0.0
        %905 = vmatprep.subr.mxu0 0.0
        %906 = vmatpush2.msra.mxu0 0.0
        %907 = vmatprep.subr.mxu0 0.0
        %908 = vmatpush2.msra.mxu0 0.0
        %909 = vmatprep.subr.mxu0 0.0
        %910 = vmatpush2.msra.mxu0 0.0
        %911 = vmatprep.subr.mxu0 0.0
        %912 = vmatpush2.msra.mxu0 0.0
        %913 = vmatprep.subr.mxu0 0.0
        %914 = vmatpush2.msra.mxu0 0.0
        %915 = vmatprep.subr.mxu0 0.0
        %916 = vmatpush2.msra.mxu0 0.0
        %917 = vmatprep.subr.mxu0 0.0
        %918 = vmatpush2.msra.mxu0 0.0
        %919 = vmatprep.mubr.f32.mxu0 0.0
        %920 = vmatmul.mubr.f32.gmra.mxu0 %v433
        %v921 = vpop.f32.mrf.mxu0
        %v922 = vadd.f32 0.0, %v921
        %v923 = vpop.f32.mrf.mxu0
        %924 = vdwg.mxu0
        %925 = vmatprep.subr.mxu0 0.0
        %926 = vmatpush1.msra.mxu0 0.0
        %927 = vmatprep.subr.mxu0 0.0
        %928 = vmatpush1.msra.mxu0 0.0
        %929 = vmatprep.subr.mxu0 0.0
        %930 = vmatpush1.msra.mxu0 0.0
        %931 = vmatprep.subr.mxu0 0.0
        %932 = vmatpush1.msra.mxu0 0.0
        %933 = vmatprep.subr.mxu0 0.0
        %934 = vmatpush1.msra.mxu0 0.0
        %935 = vmatprep.subr.mxu0 0.0
        %936 = vmatpush1.msra.mxu0 0.0
        %937 = vmatprep.subr.mxu0 0.0
        %938 = vmatpush1.msra.mxu0 0.0
        %939 = vmatprep.subr.mxu0 0.0
        %940 = vmatpush1.msra.mxu0 0.0
        %941 = vmatprep.subr.mxu0 0.0
        %942 = vmatpush1.msra.mxu0 0.0
        %943 = vmatprep.subr.mxu0 0.0
        %944 = vmatpush1.msra.mxu0 0.0
        %945 = vmatprep.subr.mxu0 0.0
        %946 = vmatpush1.msra.mxu0 0.0
        %947 = vmatprep.subr.mxu0 0.0
        %948 = vmatpush1.msra.mxu0 0.0
        %949 = vmatprep.subr.mxu0 0.0
        %950 = vmatpush1.msra.mxu0 0.0
        %951 = vmatprep.subr.mxu0 0.0
        %952 = vmatpush1.msra.mxu0 0.0
        %953 = vmatprep.subr.mxu0 0.0
        %954 = vmatpush1.msra.mxu0 %v428
        %955 = vmatprep.subr.mxu0 0.0
        %956 = vmatpush1.msra.mxu0 %v423
        %957 = vmatprep.subr.mxu0 0.0
        %958 = vmatpush2.msra.mxu0 0.0
        %959 = vmatprep.subr.mxu0 0.0
        %960 = vmatpush2.msra.mxu0 0.0
        %961 = vmatprep.subr.mxu0 0.0
        %962 = vmatpush2.msra.mxu0 0.0
        %963 = vmatprep.subr.mxu0 0.0
        %964 = vmatpush2.msra.mxu0 0.0
        %965 = vmatprep.subr.mxu0 0.0
        %966 = vmatpush2.msra.mxu0 0.0
        %967 = vmatprep.subr.mxu0 0.0
        %968 = vmatpush2.msra.mxu0 0.0
        %969 = vmatprep.subr.mxu0 0.0
        %970 = vmatpush2.msra.mxu0 0.0
        %971 = vmatprep.subr.mxu0 0.0
        %972 = vmatpush2.msra.mxu0 0.0
        %973 = vmatprep.subr.mxu0 0.0
        %974 = vmatpush2.msra.mxu0 0.0
        %975 = vmatprep.subr.mxu0 0.0
        %976 = vmatpush2.msra.mxu0 0.0
        %977 = vmatprep.subr.mxu0 0.0
        %978 = vmatpush2.msra.mxu0 0.0
        %979 = vmatprep.subr.mxu0 0.0
        %980 = vmatpush2.msra.mxu0 0.0
        %981 = vmatprep.subr.mxu0 0.0
        %982 = vmatpush2.msra.mxu0 0.0
        %983 = vmatprep.subr.mxu0 0.0
        %984 = vmatpush2.msra.mxu0 0.0
        %985 = vmatprep.subr.mxu0 0.0
        %986 = vmatpush2.msra.mxu0 0.0
        %987 = vmatprep.subr.mxu0 0.0
        %988 = vmatpush2.msra.mxu0 0.0
        %989 = vmatprep.mubr.f32.mxu0 0.0
        %990 = vmatmul.mubr.f32.gmra.mxu0 %v433
        %v991 = vpop.f32.mrf.mxu0
        %v992 = vadd.f32 0.0, %v991
        %v993 = vpop.f32.mrf.mxu0
        %994 = vdwg.mxu0
        %vm995 = vcmask 64512
        %996 = vst.msk [vmem:[%s216] sm:$0xff] %vm995, %v502
        %997 = vst.msk [vmem:[%s216 + $0x8] sm:$0xff] %vm995, %v572
        %998 = vst.msk [vmem:[%s216 + $0x10] sm:$0xff] %vm995, %v642
        %999 = vst.msk [vmem:[%s216 + $0x18] sm:$0xff] %vm995, %v712
        %1000 = vst.msk [vmem:[%s216 + $0x20] sm:$0xff] %vm995, %v782
        %1001 = vst.msk [vmem:[%s216 + $0x28] sm:$0xff] %vm995, %v852
        %1002 = vst.msk [vmem:[%s216 + $0x30] sm:$0xff] %vm995, %v922
        %1003 = vst.msk [vmem:[%s216 + $0x38] sm:$0xff] %vm995, %v992
        %s1004 = sand.u32 %s97, 1
        %s1005 = scalar_lea.sflag [#allocation4], %s1004
        %s1006 = sand.u32 %s97, 1
        %s1007 = smul.addr %s1006, 64
        %s1008 = scalar_lea.vmem [#allocation8], %s1007
        // Predicated region
        $region45: #{video_downsize.1} parent=31 // pred_check
          %p1009 = pneg %p107
        $region46: #{video_downsize.1} parent=31 // pred_check_branch
          %1011 = sbr.rel (%p1009) target = $region48
        $region47: #{video_downsize.1} parent=31 // pred_region
          %s1012 = smul.u32 8, %s21
          %s1014 = ssub.s32 1024, 1024
          %1015 = vsyncadd %s1005, %s1014
          %s1016 = smul.addr %s1012, 128
          %s1017 = scalar_lea.hbm %s3, %s1016
          %s1018 = sshll.u32 %s1008, 4
          %s1019 = int_to_ptr.vmem [resolvable:$true] %s1018
          %1024 = dma.vmem_to_hbm [thread:$0]  %s1019, 1024, %s1017, %s1005, 128, 128, 8
        $region48: #{video_downsize.1} parent=31 // pred_fallthru
          _
      $region32: #{video_downsize.1} parent=5 // pred_fallthru
        _
      %p1025 = scmp.le.s32.totalorder 2, %s16
      // Predicated region
      $region49: #{video_downsize.1} parent=5 // pred_check
        %p1026 = pneg %p1025
      $region50: #{video_downsize.1} parent=5 // pred_check_branch
        %1028 = sbr.rel (%p1026) target = $region52
      $region51: #{video_downsize.1} parent=5 // pred_region
        %s1029 = ssub.s32 %s16, 2
        // Predicated region
        $region53: #{video_downsize.1} parent=51 // pred_check
          %p1030 = pneg %p113
        $region54: #{video_downsize.1} parent=51 // pred_check_branch
          %1032 = sbr.rel (%p1030) target = $region56
        $region55: #{video_downsize.1} parent=51 // pred_region
          %s1033 = sand.u32 %s98, 1
          %s1034 = scalar_lea.sflag [#allocation4], %s1033
          %s1035 = sand.u32 %s98, 1
          %s1036 = smul.addr %s1035, 64
          %s1037 = scalar_lea.vmem [#allocation8], %s1036
          %1038 = dma.done %s1034, 1024
        $region56: #{video_downsize.1} parent=51 // pred_fallthru
          _
      $region52: #{video_downsize.1} parent=5 // pred_fallthru
        _
    $region6: #{video_downsize.1} parent=1 // loop_footer
      %s20 = sadd.s32 1, %s16
    $region7: #{video_downsize.1} parent=1 // loop_footer_branch
      %15 = sbr.rel target = $region3
    $region8: #{video_downsize.1} parent=1 // loop_exit
      _
    %1039 = vsyncpa [#allocation3], 1
    %s1040 = scalar_lea.sflag [#allocation3], 1
    %1041 = vsyncpa %s1040, 1
    %1042 = vsyncpa [#allocation6], 1
    %1043 = vsyncpa [#allocation4], 1
    %s1044 = scalar_lea.sflag [#allocation4], 1
    %1045 = vsyncpa %s1044, 1

</llo_original>
